<compile_context>
chip_gen: v7x
topology: tpu7x:2x2x1
jax: 0.10.0
libtpu: 0.0.40
codegen_flags: <defaults>
</compile_context>

<pallas_src>
import jax
import jax.numpy as jnp
from jax.experimental import pallas as pl
from jax.experimental.pallas import tpu as pltpu

D_MODEL = 1024
D_HID = 256
EPS = 1e-6  # DINO (ViT) LayerNorm eps
LANE = 128


def _round_up(a, b):
    return -(-a // b) * b


def head_kernel(x_ref, w1_ref, s1_ref, b1_ref, w2_ref, b2_ref, o_ref):
    # x tile arrives in its native dtype (f32) -- no wrapper-side cast pass.
    x = x_ref[...].astype(jnp.float32)                       # (tm, 1024)

    # One-pass LayerNorm statistics in f32 (var = E[x^2] - mu^2); no centered
    # tm x 1024 temporary is materialized.
    inv_d = jnp.float32(1.0 / D_MODEL)
    row_sum = jnp.sum(x, axis=-1, keepdims=True)              # (tm, 1)
    row_sq = jnp.sum(x * x, axis=-1, keepdims=True)           # (tm, 1)
    mu = row_sum * inv_d
    var = row_sq * inv_d - mu * mu
    rstd = jax.lax.rsqrt(var + EPS)

    # LayerNorm mean/scale folded past the first matmul (correction in f32):
    #   ((x - mu) * rstd) @ W1f = rstd * (x @ W1f - mu * colsum(W1f))
    xw = jnp.dot(x.astype(jnp.bfloat16), w1_ref[...],
                 preferred_element_type=jnp.float32)          # (tm, 256)
    h = rstd * (xw - mu * s1_ref[...]) + b1_ref[...]
    h = jnp.maximum(h, 0.0)

    # Linear(256, c_pad) -> lane-dense output block, bf16 store (f32 acc).
    o = jnp.dot(h.astype(jnp.bfloat16), w2_ref[...],
                preferred_element_type=jnp.float32) + b2_ref[...]
    o_ref[...] = o.astype(o_ref.dtype)


def fold_head_params(gamma, beta, w1, b1, w2, b2):
    """One-time parameter transform; call at init, NOT per forward."""
    D, H = w1.shape
    C = w2.shape[1]
    # Pad classifier width: 128-lane slab for tiny heads, multiple of 256 for
    # larger ones (v6e/v7x MXU is 256 wide).
    c_pad = LANE if C <= LANE else _round_up(C, 256)

    g = gamma.reshape(D, 1).astype(jnp.float32)
    w1f32 = g * w1.astype(jnp.float32)                        # gamma folded into W1
    w1f = w1f32.astype(jnp.bfloat16)                          # (1024, 256) bf16
    s1 = jnp.sum(w1f32, axis=0, keepdims=True)                # (1, 256) f32 colsum
    b1f = (beta.reshape(1, D).astype(jnp.float32) @ w1.astype(jnp.float32)
           + b1.reshape(1, H).astype(jnp.float32))            # (1, 256) f32

    w2p = jnp.zeros((H, c_pad), jnp.bfloat16).at[:, :C].set(
        w2.astype(jnp.bfloat16))                              # (256, c_pad) bf16
    b2p = jnp.zeros((1, c_pad), jnp.float32).at[:, :C].set(
        b2.reshape(1, C).astype(jnp.float32))                 # (1, c_pad) f32
    return {"w1f": w1f, "s1": s1, "b1f": b1f, "w2p": w2p, "b2p": b2p,
            "num_classes": C}


def dino_classifier_head(x_feat, params, *, tm=1024):
    """x_feat: [B, N, 1024] transformer token features -> [B, N, num_classes] f32."""
    B, N, D = x_feat.shape
    assert D == D_MODEL
    rows = B * N
    C = params["num_classes"]
    c_pad = params["w2p"].shape[1]

    # Tile sizing: clamp to the row count (no 16->512 padding blowup for tiny
    # inputs) and aim for >= 2 grid steps so both v7x TensorCores are used.
    tm_eff = min(tm, _round_up(rows, 8))
    if rows > 8:
        tm_eff = min(tm_eff, max(8, _round_up(pl.cdiv(rows, 2), 8)))
    grid_m = pl.cdiv(rows, tm_eff)

    # No dtype cast, no full-array pad in the wrapper: x is fed in its native
    # dtype and the ragged last row-tile (if any) is masked by Pallas.
    x2 = x_feat.reshape(rows, D)

    out = pl.pallas_call(
        head_kernel,
        out_shape=jax.ShapeDtypeStruct((rows, c_pad), jnp.bfloat16),
        grid_spec=pltpu.PrefetchScalarGridSpec(
            num_scalar_prefetch=0,
            grid=(grid_m,),
            in_specs=[
                pl.BlockSpec((tm_eff, D), lambda i: (i, 0)),      # x rows tile
                pl.BlockSpec((D, D_HID), lambda i: (0, 0)),       # folded W1 (bf16)
                pl.BlockSpec((1, D_HID), lambda i: (0, 0)),       # colsum(W1f) (f32)
                pl.BlockSpec((1, D_HID), lambda i: (0, 0)),       # folded b1 (f32)
                pl.BlockSpec((D_HID, c_pad), lambda i: (0, 0)),   # padded W2 (bf16)
                pl.BlockSpec((1, c_pad), lambda i: (0, 0)),       # padded b2 (f32)
            ],
            out_specs=pl.BlockSpec((tm_eff, c_pad), lambda i: (i, 0)),
        ),
        compiler_params=pltpu.CompilerParams(
            dimension_semantics=("parallel",),
            vmem_limit_bytes=32 << 20),  # stays within v7x's 64 MiB physical VMEM
    )(x2, params["w1f"], params["s1"], params["b1f"],
      params["w2p"], params["b2p"])

    # Slice/reshape consumes the bf16 slab; return f32 logits like the module.
    return out[:, :C].astype(jnp.float32).reshape(B, N, C)


def reference(x_feat, gamma, beta, w1, b1, w2, b2):
    x = x_feat.astype(jnp.float32)
    mu = jnp.mean(x, axis=-1, keepdims=True)
    var = jnp.mean((x - mu) ** 2, axis=-1, keepdims=True)
    y = (x - mu) * jax.lax.rsqrt(var + EPS) * gamma[0] + beta[0]
    h = jnp.maximum(y @ w1 + b1[0], 0.0)
    return h @ w2 + b2[0]


if __name__ == "__main__":
    key = jax.random.PRNGKey(0)
    kx, k1, k2, k3, k4 = jax.random.split(key, 5)

    B, N, C = 2, 8, 10  # batch, tokens, num_classes

    # Features as-if produced by the DINO backbone (identity stand-in).
    x_feat = jax.random.normal(kx, (B, N, D_MODEL), dtype=jnp.float32)

    # transformer.norm (LayerNorm(1024)) params
    gamma = jnp.ones((1, D_MODEL), jnp.float32)
    beta = jnp.zeros((1, D_MODEL), jnp.float32)

    # classifier params (deterministic init)
    w1 = jax.random.normal(k1, (D_MODEL, D_HID), jnp.float32) * 0.02
    b1 = jax.random.normal(k2, (1, D_HID), jnp.float32) * 0.01
    w2 = jax.random.normal(k3, (D_HID, C), jnp.float32) * 0.02
    b2 = jax.random.normal(k4, (1, C), jnp.float32) * 0.01

    # One-time weight folding/padding (hoisted out of the forward path).
    params = fold_head_params(gamma, beta, w1, b1, w2, b2)
    params = jax.tree.map(jax.block_until_ready,
                          {k: v for k, v in params.items() if k != "num_classes"}) | {
                              "num_classes": params["num_classes"]}

    out = dino_classifier_head(x_feat, params)
    out = jax.block_until_ready(out)

    ref = reference(x_feat, gamma, beta, w1, b1, w2, b2)
    assert out.shape == (B, N, C)
    # bf16 MXU inputs / bf16 store (f32 accumulation) -> ~1e-2-level tolerance.
    assert jnp.allclose(out, ref, atol=2e-2, rtol=2e-2), float(
        jnp.max(jnp.abs(out - ref)))

    print("KERNEL_OK")
</pallas_src>

<mosaic_0001>
module attributes {stable_mosaic.version = 11 : i64} {
  func.func @head_kernel(%arg0: i32, %arg1: memref<8x1024xf32, #tpu.memory_space<vmem>>, %arg2: memref<1024x256xbf16, #tpu.memory_space<vmem>>, %arg3: memref<1x256xf32, #tpu.memory_space<vmem>>, %arg4: memref<1x256xf32, #tpu.memory_space<vmem>>, %arg5: memref<256x128xbf16, #tpu.memory_space<vmem>>, %arg6: memref<1x128xf32, #tpu.memory_space<vmem>>, %arg7: memref<8x128xbf16, #tpu.memory_space<vmem>>) attributes {dimension_semantics = [#tpu.dimension_semantics<parallel>], iteration_bounds = array<i64: 2>, scalar_prefetch = 0 : i64, scratch_operands = 0 : i64, tpu.core_type = #tpu.core_type<tc>, window_params = [{transform_indices = @transform_0, window_bounds = array<i64: 8, 1024>}, {pipeline_mode = #tpu.pipeline_mode<synchronous>, transform_indices = @transform_1, window_bounds = array<i64: 1024, 256>}, {pipeline_mode = #tpu.pipeline_mode<synchronous>, transform_indices = @transform_2, window_bounds = array<i64: 1, 256>}, {pipeline_mode = #tpu.pipeline_mode<synchronous>, transform_indices = @transform_3, window_bounds = array<i64: 1, 256>}, {pipeline_mode = #tpu.pipeline_mode<synchronous>, transform_indices = @transform_4, window_bounds = array<i64: 256, 128>}, {pipeline_mode = #tpu.pipeline_mode<synchronous>, transform_indices = @transform_5, window_bounds = array<i64: 1, 128>}, {transform_indices = @transform_6, window_bounds = array<i64: 8, 128>}]} {
    %c0 = arith.constant 0 : index
    %c0_0 = arith.constant 0 : index
    %0 = vector.load %arg1[%c0, %c0_0] : memref<8x1024xf32, #tpu.memory_space<vmem>>, vector<8x1024xf32>
    %cst = arith.constant dense<0.000000e+00> : vector<8xf32>
    %1 = vector.multi_reduction <add>, %0, %cst [1] : vector<8x1024xf32> to vector<8xf32>
    %2 = vector.shape_cast %1 : vector<8xf32> to vector<8x1xf32>
    %3 = arith.mulf %0, %0 : vector<8x1024xf32>
    %cst_1 = arith.constant dense<0.000000e+00> : vector<8xf32>
    %4 = vector.multi_reduction <add>, %3, %cst_1 [1] : vector<8x1024xf32> to vector<8xf32>
    %5 = vector.shape_cast %4 : vector<8xf32> to vector<8x1xf32>
    %cst_2 = arith.constant 9.765625E-4 : f32
    %6 = vector.broadcast %cst_2 : f32 to vector<8x1xf32>
    %7 = arith.mulf %2, %6 : vector<8x1xf32>
    %cst_3 = arith.constant 9.765625E-4 : f32
    %8 = vector.broadcast %cst_3 : f32 to vector<8x1xf32>
    %9 = arith.mulf %5, %8 : vector<8x1xf32>
    %10 = arith.mulf %7, %7 : vector<8x1xf32>
    %11 = arith.subf %9, %10 : vector<8x1xf32>
    %cst_4 = arith.constant 9.99999997E-7 : f32
    %12 = vector.broadcast %cst_4 : f32 to vector<8x1xf32>
    %13 = arith.addf %11, %12 : vector<8x1xf32>
    %14 = math.rsqrt %13 : vector<8x1xf32>
    %15 = arith.truncf %0 : vector<8x1024xf32> to vector<8x1024xbf16>
    %c0_5 = arith.constant 0 : index
    %c0_6 = arith.constant 0 : index
    %16 = vector.load %arg2[%c0_5, %c0_6] : memref<1024x256xbf16, #tpu.memory_space<vmem>>, vector<1024x256xbf16>
    %cst_7 = arith.constant dense<0.000000e+00> : vector<8x256xf32>
    %17 = tpu.matmul %15, %16, %cst_7 {dimension_numbers = #tpu.dot_dimension_numbers<[1], [0], [0], [1], [0, 0, 1, 1], [], []>} : vector<8x1024xbf16>, vector<1024x256xbf16>, vector<8x256xf32> -> vector<8x256xf32>
    %c0_8 = arith.constant 0 : index
    %c0_9 = arith.constant 0 : index
    %18 = vector.load %arg3[%c0_8, %c0_9] : memref<1x256xf32, #tpu.memory_space<vmem>>, vector<1x256xf32>
    %19 = vector.broadcast %7 : vector<8x1xf32> to vector<8x256xf32>
    %20 = vector.broadcast %18 : vector<1x256xf32> to vector<8x256xf32>
    %21 = arith.mulf %19, %20 : vector<8x256xf32>
    %22 = arith.subf %17, %21 : vector<8x256xf32>
    %23 = vector.broadcast %14 : vector<8x1xf32> to vector<8x256xf32>
    %24 = arith.mulf %23, %22 : vector<8x256xf32>
    %c0_10 = arith.constant 0 : index
    %c0_11 = arith.constant 0 : index
    %25 = vector.load %arg4[%c0_10, %c0_11] : memref<1x256xf32, #tpu.memory_space<vmem>>, vector<1x256xf32>
    %26 = vector.broadcast %25 : vector<1x256xf32> to vector<8x256xf32>
    %27 = arith.addf %24, %26 : vector<8x256xf32>
    %cst_12 = arith.constant 0.000000e+00 : f32
    %28 = vector.broadcast %cst_12 : f32 to vector<8x256xf32>
    %29 = arith.maximumf %27, %28 : vector<8x256xf32>
    %30 = arith.truncf %29 : vector<8x256xf32> to vector<8x256xbf16>
    %c0_13 = arith.constant 0 : index
    %c0_14 = arith.constant 0 : index
    %31 = vector.load %arg5[%c0_13, %c0_14] : memref<256x128xbf16, #tpu.memory_space<vmem>>, vector<256x128xbf16>
    %cst_15 = arith.constant dense<0.000000e+00> : vector<8x128xf32>
    %32 = tpu.matmul %30, %31, %cst_15 {dimension_numbers = #tpu.dot_dimension_numbers<[1], [0], [0], [1], [0, 0, 1, 1], [], []>} : vector<8x256xbf16>, vector<256x128xbf16>, vector<8x128xf32> -> vector<8x128xf32>
    %c0_16 = arith.constant 0 : index
    %c0_17 = arith.constant 0 : index
    %33 = vector.load %arg6[%c0_16, %c0_17] : memref<1x128xf32, #tpu.memory_space<vmem>>, vector<1x128xf32>
    %34 = vector.broadcast %33 : vector<1x128xf32> to vector<8x128xf32>
    %35 = arith.addf %32, %34 : vector<8x128xf32>
    %36 = arith.truncf %35 : vector<8x128xf32> to vector<8x128xbf16>
    %c0_18 = arith.constant 0 : index
    %c0_19 = arith.constant 0 : index
    %37 = vector.load %arg7[%c0_18, %c0_19] : memref<8x128xbf16, #tpu.memory_space<vmem>>, vector<8x128xbf16>
    tpu.vector_store %arg7[%c0_18, %c0_19], %36 {strides = array<i32>} : memref<8x128xbf16, #tpu.memory_space<vmem>>, vector<8x128xbf16>,
    return
  }
  func.func @transform_0(%arg0: i32) -> (i32, i32) {
    %c0_i32 = arith.constant 0 : i32
    %c0_i32_0 = arith.constant 0 : i32
    return %arg0, %c0_i32 : i32, i32
  }
  func.func @transform_1(%arg0: i32) -> (i32, i32) {
    %c0_i32 = arith.constant 0 : i32
    %c0_i32_0 = arith.constant 0 : i32
    %c0_i32_1 = arith.constant 0 : i32
    return %c0_i32, %c0_i32_0 : i32, i32
  }
  func.func @transform_2(%arg0: i32) -> (i32, i32) {
    %c0_i32 = arith.constant 0 : i32
    %c0_i32_0 = arith.constant 0 : i32
    %c0_i32_1 = arith.constant 0 : i32
    return %c0_i32, %c0_i32_0 : i32, i32
  }
  func.func @transform_3(%arg0: i32) -> (i32, i32) {
    %c0_i32 = arith.constant 0 : i32
    %c0_i32_0 = arith.constant 0 : i32
    %c0_i32_1 = arith.constant 0 : i32
    return %c0_i32, %c0_i32_0 : i32, i32
  }
  func.func @transform_4(%arg0: i32) -> (i32, i32) {
    %c0_i32 = arith.constant 0 : i32
    %c0_i32_0 = arith.constant 0 : i32
    %c0_i32_1 = arith.constant 0 : i32
    return %c0_i32, %c0_i32_0 : i32, i32
  }
  func.func @transform_5(%arg0: i32) -> (i32, i32) {
    %c0_i32 = arith.constant 0 : i32
    %c0_i32_0 = arith.constant 0 : i32
    %c0_i32_1 = arith.constant 0 : i32
    return %c0_i32, %c0_i32_0 : i32, i32
  }
  func.func @transform_6(%arg0: i32) -> (i32, i32) {
    %c0_i32 = arith.constant 0 : i32
    %c0_i32_0 = arith.constant 0 : i32
    return %arg0, %c0_i32 : i32, i32
  }
}

</mosaic_0001>

<llo_original>
// kernel: tpu_custom_call.1
$region0: #{tpu_custom_call.1}
  #allocation0 [shape = 'u32[]', space=smem, size = 0x4, offset = 0x4, fixed_abs, tag = 'smem constant byte address 0x4 - core index']
  #allocation1 [shape = 'u32[144,128]{1,0:T(1,128)}', space=vmem, size = 0x12000, scoped, tag = 'internal scratch']
  %s0 = inlined_call_operand.hbm [shape: f32[16,1024], index: 0, kind: input, shape index: {}]
  %s1 = inlined_call_operand.hbm [shape: bf16[1024,256], index: 1, kind: input, shape index: {}]
  %s2 = inlined_call_operand.vmem [shape: f32[1,256], index: 2, kind: input, shape index: {}]
  %s3 = inlined_call_operand.vmem [shape: f32[1,256], index: 3, kind: input, shape index: {}]
  %s4 = inlined_call_operand.hbm [shape: bf16[256,128], index: 4, kind: input, shape index: {}]
  %s5 = inlined_call_operand.vmem [shape: f32[1,128], index: 5, kind: input, shape index: {}]
  %s6 = inlined_call_operand.hbm [shape: bf16[16,128], index: 6, kind: output, shape index: {}]
  %s7 = sld [smem:[#allocation0]]
  $region69: #{tpu_custom_call.1} parent=0
    _
  %s9 = ssub.s32 1, %s7
  %s10 = scalar_select 0, %s9, %s7
  $region1: #{tpu_custom_call.1} parent=0
    #allocation2 [shape = 'u8[65536]{0}', space=vmem, size = 0x10000, scoped, tag = 'input window, operand 0']
    #allocation3 [shape = 's32[2]{0}', space=sflag, size = 0x8, scoped, tag = 'scoped memory for tpu_custom_call.1']
    #allocation4 [shape = 's32[2]{0}', space=sflag, size = 0x8, scoped, tag = 'scoped memory for tpu_custom_call.1']
    #allocation5 [shape = 'u8[524288]{0}', space=vmem, size = 0x80000, scoped, tag = 'input window, operand 1, single buffered']
    #allocation6 [shape = 's32[1]{0}', space=sflag, size = 0x4, scoped, tag = 'scoped memory for tpu_custom_call.1']
    #allocation7 [shape = 'u8[65536]{0}', space=vmem, size = 0x10000, scoped, tag = 'input window, operand 4, single buffered']
    #allocation8 [shape = 'u8[4096]{0}', space=vmem, size = 0x1000, scoped, tag = 'output window, operand 0']
    %11 = vsyncpa [#allocation3], 0
    %s12 = scalar_lea.sflag [#allocation3], 1
    %13 = vsyncpa %s12, 0
    %14 = vsyncpa [#allocation6], 0
    %15 = vsyncpa [#allocation4], 0
    %s16 = scalar_lea.sflag [#allocation4], 1
    %17 = vsyncpa %s16, 0
    loop: start=0, step=1, limit=4
    $region2: #{tpu_custom_call.1} parent=1 // loop_pre_header
      _
    $region3: #{tpu_custom_call.1} parent=1 // loop_header
      %s19 = sphi 0, %s23
      %p20 = scmp.ge.s32.totalorder %s19, 4
      %s29 = sphi 0, %s31
      %s32 = sphi 0, %s29
      %s33 = sphi 0, %s32
      %s49 = sphi 0, %s33
      %s53 = sphi 0, %s53
      %s55 = sphi 0, %s53
      %s56 = sphi 0, %s55
      %s70 = sphi 0, %s56
      %s74 = sphi 0, %s74
      %s76 = sphi 0, %s74
      %s77 = sphi 0, %s76
      %s91 = sphi 0, %s77
      %s95 = sphi 0, %s95
      %s97 = sphi 0, %s95
      %s98 = sphi 0, %s97
      %s112 = sphi 0, %s98
      %s116 = sphi 0, %s116
      %s118 = sphi 0, %s116
      %s119 = sphi 0, %s118
      %s133 = sphi 0, %s119
      %s137 = sphi 0, %s137
      %s139 = sphi 0, %s137
      %s140 = sphi 0, %s139
      %s154 = sphi 0, %s140
      %s160 = sphi 0, %s162
      %s163 = sphi 0, %s160
      %s164 = sphi 0, %s163
      %s180 = sphi 0, %s164
    $region4: #{tpu_custom_call.1} parent=1 // loop_header_branch
      %22 = sbr.rel (%p20) target = $region8
    $region5: #{tpu_custom_call.1} parent=1 // loop_body
      %s24 = ssub.s32 %s19, 1
      %s25 = ssub.s32 %s19, 2
      %s26 = sadd.s32 %s19, 1
      %s27 = ssub.s32 %s19, %s26
      %p28 = scmp.eq.s32.totalorder %s27, 0
      %s30 = sadd.s32 %s29, 1
      %s31 = scalar_select %p28, %s29, %s30
      %p34 = pneg %p28
      %p35 = scmp.eq.s32.totalorder %s19, 1
      %p36 = por %p34, %p35
      %p37 = scmp.ne.s32.totalorder %s29, %s32
      %p38 = scmp.eq.s32.totalorder %s19, 0
      %p39 = por %p37, %p38
      %p40 = scmp.ne.s32.totalorder %s29, %s32
      %p41 = scmp.eq.s32.totalorder %s24, 1
      %p42 = por %p40, %p41
      %p43 = scmp.ne.s32.totalorder %s32, %s33
      %p44 = scmp.eq.s32.totalorder %s24, 0
      %p45 = por %p43, %p44
      %p46 = scmp.ne.s32.totalorder %s32, %s33
      %p47 = scmp.eq.s32.totalorder %s25, 1
      %p48 = por %p46, %p47
      %p50 = scmp.ne.s32.totalorder %s33, %s49
      %p51 = scmp.eq.s32.totalorder %s25, 0
      %p52 = por %p50, %p51
      %s54 = sadd.s32 %s53, 1
      %p57 = scmp.eq.s32.totalorder %s19, 1
      %p58 = scmp.ne.s32.totalorder %s53, %s55
      %p59 = scmp.eq.s32.totalorder %s19, 0
      %p60 = por %p58, %p59
      %p61 = scmp.ne.s32.totalorder %s53, %s55
      %p62 = scmp.eq.s32.totalorder %s24, 1
      %p63 = por %p61, %p62
      %p64 = scmp.ne.s32.totalorder %s55, %s56
      %p65 = scmp.eq.s32.totalorder %s24, 0
      %p66 = por %p64, %p65
      %p67 = scmp.ne.s32.totalorder %s55, %s56
      %p68 = scmp.eq.s32.totalorder %s25, 1
      %p69 = por %p67, %p68
      %p71 = scmp.ne.s32.totalorder %s56, %s70
      %p72 = scmp.eq.s32.totalorder %s25, 0
      %p73 = por %p71, %p72
      %s75 = sadd.s32 %s74, 1
      %p78 = scmp.eq.s32.totalorder %s19, 1
      %p79 = scmp.ne.s32.totalorder %s74, %s76
      %p80 = scmp.eq.s32.totalorder %s19, 0
      %p81 = por %p79, %p80
      %p82 = scmp.ne.s32.totalorder %s74, %s76
      %p83 = scmp.eq.s32.totalorder %s24, 1
      %p84 = por %p82, %p83
      %p85 = scmp.ne.s32.totalorder %s76, %s77
      %p86 = scmp.eq.s32.totalorder %s24, 0
      %p87 = por %p85, %p86
      %p88 = scmp.ne.s32.totalorder %s76, %s77
      %p89 = scmp.eq.s32.totalorder %s25, 1
      %p90 = por %p88, %p89
      %p92 = scmp.ne.s32.totalorder %s77, %s91
      %p93 = scmp.eq.s32.totalorder %s25, 0
      %p94 = por %p92, %p93
      %s96 = sadd.s32 %s95, 1
      %p99 = scmp.eq.s32.totalorder %s19, 1
      %p100 = scmp.ne.s32.totalorder %s95, %s97
      %p101 = scmp.eq.s32.totalorder %s19, 0
      %p102 = por %p100, %p101
      %p103 = scmp.ne.s32.totalorder %s95, %s97
      %p104 = scmp.eq.s32.totalorder %s24, 1
      %p105 = por %p103, %p104
      %p106 = scmp.ne.s32.totalorder %s97, %s98
      %p107 = scmp.eq.s32.totalorder %s24, 0
      %p108 = por %p106, %p107
      %p109 = scmp.ne.s32.totalorder %s97, %s98
      %p110 = scmp.eq.s32.totalorder %s25, 1
      %p111 = por %p109, %p110
      %p113 = scmp.ne.s32.totalorder %s98, %s112
      %p114 = scmp.eq.s32.totalorder %s25, 0
      %p115 = por %p113, %p114
      %s117 = sadd.s32 %s116, 1
      %p120 = scmp.eq.s32.totalorder %s19, 1
      %p121 = scmp.ne.s32.totalorder %s116, %s118
      %p122 = scmp.eq.s32.totalorder %s19, 0
      %p123 = por %p121, %p122
      %p124 = scmp.ne.s32.totalorder %s116, %s118
      %p125 = scmp.eq.s32.totalorder %s24, 1
      %p126 = por %p124, %p125
      %p127 = scmp.ne.s32.totalorder %s118, %s119
      %p128 = scmp.eq.s32.totalorder %s24, 0
      %p129 = por %p127, %p128
      %p130 = scmp.ne.s32.totalorder %s118, %s119
      %p131 = scmp.eq.s32.totalorder %s25, 1
      %p132 = por %p130, %p131
      %p134 = scmp.ne.s32.totalorder %s119, %s133
      %p135 = scmp.eq.s32.totalorder %s25, 0
      %p136 = por %p134, %p135
      %s138 = sadd.s32 %s137, 1
      %p141 = scmp.eq.s32.totalorder %s19, 1
      %p142 = scmp.ne.s32.totalorder %s137, %s139
      %p143 = scmp.eq.s32.totalorder %s19, 0
      %p144 = por %p142, %p143
      %p145 = scmp.ne.s32.totalorder %s137, %s139
      %p146 = scmp.eq.s32.totalorder %s24, 1
      %p147 = por %p145, %p146
      %p148 = scmp.ne.s32.totalorder %s139, %s140
      %p149 = scmp.eq.s32.totalorder %s24, 0
      %p150 = por %p148, %p149
      %p151 = scmp.ne.s32.totalorder %s139, %s140
      %p152 = scmp.eq.s32.totalorder %s25, 1
      %p153 = por %p151, %p152
      %p155 = scmp.ne.s32.totalorder %s140, %s154
      %p156 = scmp.eq.s32.totalorder %s25, 0
      %p157 = por %p155, %p156
      %s158 = ssub.s32 %s19, %s26
      %p159 = scmp.eq.s32.totalorder %s158, 0
      %s161 = sadd.s32 %s160, 1
      %s162 = scalar_select %p159, %s160, %s161
      %p165 = pneg %p159
      %p166 = scmp.eq.s32.totalorder %s19, 1
      %p167 = por %p165, %p166
      %p168 = scmp.ne.s32.totalorder %s160, %s163
      %p169 = scmp.eq.s32.totalorder %s19, 0
      %p170 = por %p168, %p169
      %p171 = scmp.ne.s32.totalorder %s160, %s163
      %p172 = scmp.eq.s32.totalorder %s24, 1
      %p173 = por %p171, %p172
      %p174 = scmp.ne.s32.totalorder %s163, %s164
      %p175 = scmp.eq.s32.totalorder %s24, 0
      %p176 = por %p174, %p175
      %p177 = scmp.ne.s32.totalorder %s163, %s164
      %p178 = scmp.eq.s32.totalorder %s25, 1
      %p179 = por %p177, %p178
      %p181 = scmp.ne.s32.totalorder %s164, %s180
      %p182 = scmp.eq.s32.totalorder %s25, 0
      %p183 = por %p181, %p182
      %p184 = scmp.le.s32.totalorder 1, %s19
      %p185 = scmp.lt.s32.totalorder %s19, 3
      %p186 = pnand %p184, %p185
      %p187 = pneg %p186
      // Predicated region
      $region9: #{tpu_custom_call.1} parent=5 // pred_check
        _
      $region10: #{tpu_custom_call.1} parent=5 // pred_check_branch
        %189 = sbr.rel (%p186) target = $region12
      $region11: #{tpu_custom_call.1} parent=5 // pred_region
        %s190 = ssub.s32 %s19, 1
        // Predicated region
        $region13: #{tpu_custom_call.1} parent=11 // pred_check
          %p191 = pneg %p66
        $region14: #{tpu_custom_call.1} parent=11 // pred_check_branch
          %193 = sbr.rel (%p191) target = $region16
        $region15: #{tpu_custom_call.1} parent=11 // pred_region
          %s195 = ssub.s32 16384, 16384
          %196 = vsyncadd [#allocation6], %s195
          %s197 = sshll.u32 [#allocation5], 4
          %s198 = int_to_ptr.vmem [resolvable:$true] %s197
          %203 = dma.hbm_to_vmem [thread:$0]  %s1, 16384, %s198, [#allocation6], 128, 128, 8
        $region16: #{tpu_custom_call.1} parent=11 // pred_fallthru
          _
        // Predicated region
        $region17: #{tpu_custom_call.1} parent=11 // pred_check
          %p204 = pneg %p87
        $region18: #{tpu_custom_call.1} parent=11 // pred_check_branch
          %206 = sbr.rel (%p204) target = $region20
        $region19: #{tpu_custom_call.1} parent=11 // pred_region
          _
        $region20: #{tpu_custom_call.1} parent=11 // pred_fallthru
          _
        // Predicated region
        $region21: #{tpu_custom_call.1} parent=11 // pred_check
          %p207 = pneg %p108
        $region22: #{tpu_custom_call.1} parent=11 // pred_check_branch
          %209 = sbr.rel (%p207) target = $region24
        $region23: #{tpu_custom_call.1} parent=11 // pred_region
          _
        $region24: #{tpu_custom_call.1} parent=11 // pred_fallthru
          _
        // Predicated region
        $region25: #{tpu_custom_call.1} parent=11 // pred_check
          %p210 = pneg %p129
        $region26: #{tpu_custom_call.1} parent=11 // pred_check_branch
          %212 = sbr.rel (%p210) target = $region28
        $region27: #{tpu_custom_call.1} parent=11 // pred_region
          %s214 = ssub.s32 2048, 2048
          %215 = vsyncadd [#allocation6], %s214
          %s216 = sshll.u32 [#allocation7], 4
          %s217 = int_to_ptr.vmem [resolvable:$true] %s216
          %222 = dma.hbm_to_vmem [thread:$0]  %s4, 2048, %s217, [#allocation6], 64, 64, 4
        $region28: #{tpu_custom_call.1} parent=11 // pred_fallthru
          _
        // Predicated region
        $region29: #{tpu_custom_call.1} parent=11 // pred_check
          %p223 = pneg %p150
        $region30: #{tpu_custom_call.1} parent=11 // pred_check_branch
          %225 = sbr.rel (%p223) target = $region32
        $region31: #{tpu_custom_call.1} parent=11 // pred_region
          _
        $region32: #{tpu_custom_call.1} parent=11 // pred_fallthru
          _
      $region12: #{tpu_custom_call.1} parent=5 // pred_fallthru
        _
      %p226 = scmp.lt.s32.totalorder %s19, 2
      // Predicated region
      $region33: #{tpu_custom_call.1} parent=5 // pred_check
        %p227 = pneg %p226
      $region34: #{tpu_custom_call.1} parent=5 // pred_check_branch
        %229 = sbr.rel (%p227) target = $region36
      $region35: #{tpu_custom_call.1} parent=5 // pred_region
        // Predicated region
        $region37: #{tpu_custom_call.1} parent=35 // pred_check
          %p230 = pneg %p39
        $region38: #{tpu_custom_call.1} parent=35 // pred_check_branch
          %232 = sbr.rel (%p230) target = $region40
        $region39: #{tpu_custom_call.1} parent=35 // pred_region
          %s233 = sand.u32 %s29, 1
          %s234 = scalar_lea.sflag [#allocation3], %s233
          %s235 = sand.u32 %s29, 1
          %s236 = smul.addr %s235, 64
          %s237 = scalar_lea.vmem [#allocation2], %s236
          %s239 = ssub.s32 1024, 1024
          %240 = vsyncadd %s234, %s239
          %s241 = smul.addr %s19, 8
          %s242 = smul.addr %s241, 128
          %s243 = scalar_lea.hbm %s0, %s242
          %s245 = sshll.u32 %s237, 4
          %s246 = int_to_ptr.vmem [resolvable:$true] %s245
          %248 = dma.hbm_to_vmem [thread:$0]  %s243, 1024, %s246, %s234
        $region40: #{tpu_custom_call.1} parent=35 // pred_fallthru
          _
      $region36: #{tpu_custom_call.1} parent=5 // pred_fallthru
        _
      %p249 = scmp.le.s32.totalorder 1, %s19
      %p250 = scmp.lt.s32.totalorder %s19, 3
      %p251 = pnand %p249, %p250
      %p252 = pneg %p251
      // Predicated region
      $region41: #{tpu_custom_call.1} parent=5 // pred_check
        _
      $region42: #{tpu_custom_call.1} parent=5 // pred_check_branch
        %254 = sbr.rel (%p251) target = $region44
      $region43: #{tpu_custom_call.1} parent=5 // pred_region
        %s255 = ssub.s32 %s19, 1
        %s256 = sand.u32 %s32, 1
        %s257 = scalar_lea.sflag [#allocation3], %s256
        %s258 = sand.u32 %s32, 1
        %s259 = smul.addr %s258, 64
        %s260 = scalar_lea.vmem [#allocation2], %s259
        // Predicated region
        $region45: #{tpu_custom_call.1} parent=43 // pred_check
          %p261 = pneg %p45
        $region46: #{tpu_custom_call.1} parent=43 // pred_check_branch
          %263 = sbr.rel (%p261) target = $region48
        $region47: #{tpu_custom_call.1} parent=43 // pred_region
          %264 = dma.done %s257, 1024
        $region48: #{tpu_custom_call.1} parent=43 // pred_fallthru
          _
        // Predicated region
        $region49: #{tpu_custom_call.1} parent=43 // pred_check
          %p265 = pneg %p66
        $region50: #{tpu_custom_call.1} parent=43 // pred_check_branch
          %267 = sbr.rel (%p265) target = $region52
        $region51: #{tpu_custom_call.1} parent=43 // pred_region
          %268 = dma.done [#allocation6], 16384
        $region52: #{tpu_custom_call.1} parent=43 // pred_fallthru
          _
        // Predicated region
        $region53: #{tpu_custom_call.1} parent=43 // pred_check
          %p269 = pneg %p129
        $region54: #{tpu_custom_call.1} parent=43 // pred_check_branch
          %271 = sbr.rel (%p269) target = $region56
        $region55: #{tpu_custom_call.1} parent=43 // pred_region
          %272 = dma.done [#allocation6], 2048
        $region56: #{tpu_custom_call.1} parent=43 // pred_fallthru
          _
        %s273 = sand.u32 %s32, 1
        %s274 = scalar_lea.sflag [#allocation3], %s273
        %s275 = sand.u32 %s32, 1
        %s276 = smul.addr %s275, 64
        %s277 = scalar_lea.vmem [#allocation2], %s276
        %p278 = pneg %p45
        %p279 = pneg %p42
        %p280 = pneg %p66
        %p281 = pneg %p63
        %p282 = pneg %p87
        %p283 = pneg %p84
        %p284 = pneg %p108
        %p285 = pneg %p105
        %p286 = pneg %p129
        %p287 = pneg %p126
        %p288 = pneg %p150
        %p289 = pneg %p147
        %p290 = pneg %p176
        %p291 = pneg %p173
        %s292 = sand.u32 %s163, 1
        %s293 = scalar_lea.sflag [#allocation4], %s292
        %s294 = sand.u32 %s163, 1
        %s295 = smul.addr %s294, 4
        %s296 = scalar_lea.vmem [#allocation8], %s295
        %v298 = vld [vmem:[%s260] sm:$0xff]
        %v299 = vld [vmem:[%s260 + $0x8] sm:$0xff]
        %v300 = vld [vmem:[%s260 + $0x10] sm:$0xff]
        %v301 = vld [vmem:[%s260 + $0x18] sm:$0xff]
        %v302 = vld [vmem:[%s260 + $0x20] sm:$0xff]
        %v303 = vld [vmem:[%s260 + $0x28] sm:$0xff]
        %v304 = vld [vmem:[%s260 + $0x30] sm:$0xff]
        %v305 = vld [vmem:[%s260 + $0x38] sm:$0xff]
        %v306 = vadd.f32 %v298, %v299
        %v307 = vadd.f32 %v306, %v300
        %v308 = vadd.f32 %v307, %v301
        %v309 = vadd.f32 %v308, %v302
        %v310 = vadd.f32 %v309, %v303
        %v311 = vadd.f32 %v310, %v304
        %v312 = vadd.f32 %v311, %v305
        %313 = vadd.xlane.f32.xlu0 %v312
        %v314 = vpop.xlane.xlu0 %313
        %v315 = vmul.f32 %v298, %v298
        %v316 = vmul.f32 %v299, %v299
        %v317 = vmul.f32 %v300, %v300
        %v318 = vmul.f32 %v301, %v301
        %v319 = vmul.f32 %v302, %v302
        %v320 = vmul.f32 %v303, %v303
        %v321 = vmul.f32 %v304, %v304
        %v322 = vmul.f32 %v305, %v305
        %v323 = vadd.f32 %v315, %v316
        %v324 = vadd.f32 %v323, %v317
        %v325 = vadd.f32 %v324, %v318
        %v326 = vadd.f32 %v325, %v319
        %v327 = vadd.f32 %v326, %v320
        %v328 = vadd.f32 %v327, %v321
        %v329 = vadd.f32 %v328, %v322
        %330 = vadd.xlane.f32.xlu0 %v329
        %v331 = vpop.xlane.xlu0 %330
        %v332 = vmul.f32 %v314, 0.0009765625
        %v333 = vmul.f32 %v331, 0.0009765625
        %v334 = vmul.f32 %v332, %v332
        %v335 = vsub.f32 %v333, %v334
        %v336 = vadd.f32 %v335, 1e-06
        %v337 = vrsqrt.pop %v336
        %v338 = vpack.c.bf16 %v298, %v298
        %v339 = vpack.c.bf16 %v299, %v299
        %v340 = vpack.c.bf16 %v300, %v300
        %v341 = vpack.c.bf16 %v301, %v301
        %v342 = vpack.c.bf16 %v302, %v302
        %v343 = vpack.c.bf16 %v303, %v303
        %v344 = vpack.c.bf16 %v304, %v304
        %v345 = vpack.c.bf16 %v305, %v305
        %v346 = vld [vmem:[#allocation5] sm:$0xff]
        %v347 = vld [vmem:[#allocation5 + $0x8] sm:$0xff]
        %v348 = vld [vmem:[#allocation5 + $0x10] sm:$0xff]
        %v349 = vld [vmem:[#allocation5 + $0x18] sm:$0xff]
        %v350 = vld [vmem:[#allocation5 + $0x20] sm:$0xff]
        %v351 = vld [vmem:[#allocation5 + $0x28] sm:$0xff]
        %v352 = vld [vmem:[#allocation5 + $0x30] sm:$0xff]
        %v353 = vld [vmem:[#allocation5 + $0x38] sm:$0xff]
        %v354 = vld [vmem:[#allocation5 + $0x40] sm:$0xff]
        %v355 = vld [vmem:[#allocation5 + $0x48] sm:$0xff]
        %v356 = vld [vmem:[#allocation5 + $0x50] sm:$0xff]
        %v357 = vld [vmem:[#allocation5 + $0x58] sm:$0xff]
        %v358 = vld [vmem:[#allocation5 + $0x60] sm:$0xff]
        %v359 = vld [vmem:[#allocation5 + $0x68] sm:$0xff]
        %v360 = vld [vmem:[#allocation5 + $0x70] sm:$0xff]
        %v361 = vld [vmem:[#allocation5 + $0x78] sm:$0xff]
        %v362 = vld [vmem:[#allocation5 + $0x80] sm:$0xff]
        %v363 = vld [vmem:[#allocation5 + $0x88] sm:$0xff]
        %v364 = vld [vmem:[#allocation5 + $0x90] sm:$0xff]
        %v365 = vld [vmem:[#allocation5 + $0x98] sm:$0xff]
        %v366 = vld [vmem:[#allocation5 + $0xa0] sm:$0xff]
        %v367 = vld [vmem:[#allocation5 + $0xa8] sm:$0xff]
        %v368 = vld [vmem:[#allocation5 + $0xb0] sm:$0xff]
        %v369 = vld [vmem:[#allocation5 + $0xb8] sm:$0xff]
        %v370 = vld [vmem:[#allocation5 + $0xc0] sm:$0xff]
        %v371 = vld [vmem:[#allocation5 + $0xc8] sm:$0xff]
        %v372 = vld [vmem:[#allocation5 + $0xd0] sm:$0xff]
        %v373 = vld [vmem:[#allocation5 + $0xd8] sm:$0xff]
        %v374 = vld [vmem:[#allocation5 + $0xe0] sm:$0xff]
        %v375 = vld [vmem:[#allocation5 + $0xe8] sm:$0xff]
        %v376 = vld [vmem:[#allocation5 + $0xf0] sm:$0xff]
        %v377 = vld [vmem:[#allocation5 + $0xf8] sm:$0xff]
        %v378 = vld [vmem:[#allocation5 + $0x100] sm:$0xff]
        %v379 = vld [vmem:[#allocation5 + $0x108] sm:$0xff]
        %v380 = vld [vmem:[#allocation5 + $0x110] sm:$0xff]
        %v381 = vld [vmem:[#allocation5 + $0x118] sm:$0xff]
        %v382 = vld [vmem:[#allocation5 + $0x120] sm:$0xff]
        %v383 = vld [vmem:[#allocation5 + $0x128] sm:$0xff]
        %v384 = vld [vmem:[#allocation5 + $0x130] sm:$0xff]
        %v385 = vld [vmem:[#allocation5 + $0x138] sm:$0xff]
        %v386 = vld [vmem:[#allocation5 + $0x140] sm:$0xff]
        %v387 = vld [vmem:[#allocation5 + $0x148] sm:$0xff]
        %v388 = vld [vmem:[#allocation5 + $0x150] sm:$0xff]
        %v389 = vld [vmem:[#allocation5 + $0x158] sm:$0xff]
        %v390 = vld [vmem:[#allocation5 + $0x160] sm:$0xff]
        %v391 = vld [vmem:[#allocation5 + $0x168] sm:$0xff]
        %v392 = vld [vmem:[#allocation5 + $0x170] sm:$0xff]
        %v393 = vld [vmem:[#allocation5 + $0x178] sm:$0xff]
        %v394 = vld [vmem:[#allocation5 + $0x180] sm:$0xff]
        %v395 = vld [vmem:[#allocation5 + $0x188] sm:$0xff]
        %v396 = vld [vmem:[#allocation5 + $0x190] sm:$0xff]
        %v397 = vld [vmem:[#allocation5 + $0x198] sm:$0xff]
        %v398 = vld [vmem:[#allocation5 + $0x1a0] sm:$0xff]
        %v399 = vld [vmem:[#allocation5 + $0x1a8] sm:$0xff]
        %v400 = vld [vmem:[#allocation5 + $0x1b0] sm:$0xff]
        %v401 = vld [vmem:[#allocation5 + $0x1b8] sm:$0xff]
        %v402 = vld [vmem:[#allocation5 + $0x1c0] sm:$0xff]
        %v403 = vld [vmem:[#allocation5 + $0x1c8] sm:$0xff]
        %v404 = vld [vmem:[#allocation5 + $0x1d0] sm:$0xff]
        %v405 = vld [vmem:[#allocation5 + $0x1d8] sm:$0xff]
        %v406 = vld [vmem:[#allocation5 + $0x1e0] sm:$0xff]
        %v407 = vld [vmem:[#allocation5 + $0x1e8] sm:$0xff]
        %v408 = vld [vmem:[#allocation5 + $0x1f0] sm:$0xff]
        %v409 = vld [vmem:[#allocation5 + $0x1f8] sm:$0xff]
        %v410 = vld [vmem:[#allocation5 + $0x200] sm:$0xff]
        %v411 = vld [vmem:[#allocation5 + $0x208] sm:$0xff]
        %v412 = vld [vmem:[#allocation5 + $0x210] sm:$0xff]
        %v413 = vld [vmem:[#allocation5 + $0x218] sm:$0xff]
        %v414 = vld [vmem:[#allocation5 + $0x220] sm:$0xff]
        %v415 = vld [vmem:[#allocation5 + $0x228] sm:$0xff]
        %v416 = vld [vmem:[#allocation5 + $0x230] sm:$0xff]
        %v417 = vld [vmem:[#allocation5 + $0x238] sm:$0xff]
        %v418 = vld [vmem:[#allocation5 + $0x240] sm:$0xff]
        %v419 = vld [vmem:[#allocation5 + $0x248] sm:$0xff]
        %v420 = vld [vmem:[#allocation5 + $0x250] sm:$0xff]
        %v421 = vld [vmem:[#allocation5 + $0x258] sm:$0xff]
        %v422 = vld [vmem:[#allocation5 + $0x260] sm:$0xff]
        %v423 = vld [vmem:[#allocation5 + $0x268] sm:$0xff]
        %v424 = vld [vmem:[#allocation5 + $0x270] sm:$0xff]
        %v425 = vld [vmem:[#allocation5 + $0x278] sm:$0xff]
        %v426 = vld [vmem:[#allocation5 + $0x280] sm:$0xff]
        %v427 = vld [vmem:[#allocation5 + $0x288] sm:$0xff]
        %v428 = vld [vmem:[#allocation5 + $0x290] sm:$0xff]
        %v429 = vld [vmem:[#allocation5 + $0x298] sm:$0xff]
        %v430 = vld [vmem:[#allocation5 + $0x2a0] sm:$0xff]
        %v431 = vld [vmem:[#allocation5 + $0x2a8] sm:$0xff]
        %v432 = vld [vmem:[#allocation5 + $0x2b0] sm:$0xff]
        %v433 = vld [vmem:[#allocation5 + $0x2b8] sm:$0xff]
        %v434 = vld [vmem:[#allocation5 + $0x2c0] sm:$0xff]
        %v435 = vld [vmem:[#allocation5 + $0x2c8] sm:$0xff]
        %v436 = vld [vmem:[#allocation5 + $0x2d0] sm:$0xff]
        %v437 = vld [vmem:[#allocation5 + $0x2d8] sm:$0xff]
        %v438 = vld [vmem:[#allocation5 + $0x2e0] sm:$0xff]
        %v439 = vld [vmem:[#allocation5 + $0x2e8] sm:$0xff]
        %v440 = vld [vmem:[#allocation5 + $0x2f0] sm:$0xff]
        %v441 = vld [vmem:[#allocation5 + $0x2f8] sm:$0xff]
        %v442 = vld [vmem:[#allocation5 + $0x300] sm:$0xff]
        %v443 = vld [vmem:[#allocation5 + $0x308] sm:$0xff]
        %v444 = vld [vmem:[#allocation5 + $0x310] sm:$0xff]
        %v445 = vld [vmem:[#allocation5 + $0x318] sm:$0xff]
        %v446 = vld [vmem:[#allocation5 + $0x320] sm:$0xff]
        %v447 = vld [vmem:[#allocation5 + $0x328] sm:$0xff]
        %v448 = vld [vmem:[#allocation5 + $0x330] sm:$0xff]
        %v449 = vld [vmem:[#allocation5 + $0x338] sm:$0xff]
        %v450 = vld [vmem:[#allocation5 + $0x340] sm:$0xff]
        %v451 = vld [vmem:[#allocation5 + $0x348] sm:$0xff]
        %v452 = vld [vmem:[#allocation5 + $0x350] sm:$0xff]
        %v453 = vld [vmem:[#allocation5 + $0x358] sm:$0xff]
        %v454 = vld [vmem:[#allocation5 + $0x360] sm:$0xff]
        %v455 = vld [vmem:[#allocation5 + $0x368] sm:$0xff]
        %v456 = vld [vmem:[#allocation5 + $0x370] sm:$0xff]
        %v457 = vld [vmem:[#allocation5 + $0x378] sm:$0xff]
        %v458 = vld [vmem:[#allocation5 + $0x380] sm:$0xff]
        %v459 = vld [vmem:[#allocation5 + $0x388] sm:$0xff]
        %v460 = vld [vmem:[#allocation5 + $0x390] sm:$0xff]
        %v461 = vld [vmem:[#allocation5 + $0x398] sm:$0xff]
        %v462 = vld [vmem:[#allocation5 + $0x3a0] sm:$0xff]
        %v463 = vld [vmem:[#allocation5 + $0x3a8] sm:$0xff]
        %v464 = vld [vmem:[#allocation5 + $0x3b0] sm:$0xff]
        %v465 = vld [vmem:[#allocation5 + $0x3b8] sm:$0xff]
        %v466 = vld [vmem:[#allocation5 + $0x3c0] sm:$0xff]
        %v467 = vld [vmem:[#allocation5 + $0x3c8] sm:$0xff]
        %v468 = vld [vmem:[#allocation5 + $0x3d0] sm:$0xff]
        %v469 = vld [vmem:[#allocation5 + $0x3d8] sm:$0xff]
        %v470 = vld [vmem:[#allocation5 + $0x3e0] sm:$0xff]
        %v471 = vld [vmem:[#allocation5 + $0x3e8] sm:$0xff]
        %v472 = vld [vmem:[#allocation5 + $0x3f0] sm:$0xff]
        %v473 = vld [vmem:[#allocation5 + $0x3f8] sm:$0xff]
        %v602 = vunpack.c.l.b16 %v346
        %v603 = vunpack.c.h.b16 %v346
        %v604 = vunpack.c.l.b16 %v347
        %v605 = vunpack.c.h.b16 %v347
        %v606 = vunpack.c.l.b16 %v348
        %v607 = vunpack.c.h.b16 %v348
        %v608 = vunpack.c.l.b16 %v349
        %v609 = vunpack.c.h.b16 %v349
        %v610 = vunpack.c.l.b16 %v350
        %v611 = vunpack.c.h.b16 %v350
        %v612 = vunpack.c.l.b16 %v351
        %v613 = vunpack.c.h.b16 %v351
        %v614 = vunpack.c.l.b16 %v352
        %v615 = vunpack.c.h.b16 %v352
        %v616 = vunpack.c.l.b16 %v353
        %v617 = vunpack.c.h.b16 %v353
        %v618 = vunpack.c.l.b16 %v354
        %v619 = vunpack.c.h.b16 %v354
        %v620 = vunpack.c.l.b16 %v355
        %v621 = vunpack.c.h.b16 %v355
        %v622 = vunpack.c.l.b16 %v356
        %v623 = vunpack.c.h.b16 %v356
        %v624 = vunpack.c.l.b16 %v357
        %v625 = vunpack.c.h.b16 %v357
        %v626 = vunpack.c.l.b16 %v358
        %v627 = vunpack.c.h.b16 %v358
        %v628 = vunpack.c.l.b16 %v359
        %v629 = vunpack.c.h.b16 %v359
        %v630 = vunpack.c.l.b16 %v360
        %v631 = vunpack.c.h.b16 %v360
        %v632 = vunpack.c.l.b16 %v361
        %v633 = vunpack.c.h.b16 %v361
        %v634 = vunpack.c.l.b16 %v362
        %v635 = vunpack.c.h.b16 %v362
        %v636 = vunpack.c.l.b16 %v363
        %v637 = vunpack.c.h.b16 %v363
        %v638 = vunpack.c.l.b16 %v364
        %v639 = vunpack.c.h.b16 %v364
        %v640 = vunpack.c.l.b16 %v365
        %v641 = vunpack.c.h.b16 %v365
        %v642 = vunpack.c.l.b16 %v366
        %v643 = vunpack.c.h.b16 %v366
        %v644 = vunpack.c.l.b16 %v367
        %v645 = vunpack.c.h.b16 %v367
        %v646 = vunpack.c.l.b16 %v368
        %v647 = vunpack.c.h.b16 %v368
        %v648 = vunpack.c.l.b16 %v369
        %v649 = vunpack.c.h.b16 %v369
        %v650 = vunpack.c.l.b16 %v370
        %v651 = vunpack.c.h.b16 %v370
        %v652 = vunpack.c.l.b16 %v371
        %v653 = vunpack.c.h.b16 %v371
        %v654 = vunpack.c.l.b16 %v372
        %v655 = vunpack.c.h.b16 %v372
        %v656 = vunpack.c.l.b16 %v373
        %v657 = vunpack.c.h.b16 %v373
        %v658 = vunpack.c.l.b16 %v374
        %v659 = vunpack.c.h.b16 %v374
        %v660 = vunpack.c.l.b16 %v375
        %v661 = vunpack.c.h.b16 %v375
        %v662 = vunpack.c.l.b16 %v376
        %v663 = vunpack.c.h.b16 %v376
        %v664 = vunpack.c.l.b16 %v377
        %v665 = vunpack.c.h.b16 %v377
        %v666 = vunpack.c.l.b16 %v378
        %v667 = vunpack.c.h.b16 %v378
        %v668 = vunpack.c.l.b16 %v379
        %v669 = vunpack.c.h.b16 %v379
        %v670 = vunpack.c.l.b16 %v380
        %v671 = vunpack.c.h.b16 %v380
        %v672 = vunpack.c.l.b16 %v381
        %v673 = vunpack.c.h.b16 %v381
        %v674 = vunpack.c.l.b16 %v382
        %v675 = vunpack.c.h.b16 %v382
        %v676 = vunpack.c.l.b16 %v383
        %v677 = vunpack.c.h.b16 %v383
        %v678 = vunpack.c.l.b16 %v384
        %v679 = vunpack.c.h.b16 %v384
        %v680 = vunpack.c.l.b16 %v385
        %v681 = vunpack.c.h.b16 %v385
        %v682 = vunpack.c.l.b16 %v386
        %v683 = vunpack.c.h.b16 %v386
        %v684 = vunpack.c.l.b16 %v387
        %v685 = vunpack.c.h.b16 %v387
        %v686 = vunpack.c.l.b16 %v388
        %v687 = vunpack.c.h.b16 %v388
        %v688 = vunpack.c.l.b16 %v389
        %v689 = vunpack.c.h.b16 %v389
        %v690 = vunpack.c.l.b16 %v390
        %v691 = vunpack.c.h.b16 %v390
        %v692 = vunpack.c.l.b16 %v391
        %v693 = vunpack.c.h.b16 %v391
        %v694 = vunpack.c.l.b16 %v392
        %v695 = vunpack.c.h.b16 %v392
        %v696 = vunpack.c.l.b16 %v393
        %v697 = vunpack.c.h.b16 %v393
        %v698 = vunpack.c.l.b16 %v394
        %v699 = vunpack.c.h.b16 %v394
        %v700 = vunpack.c.l.b16 %v395
        %v701 = vunpack.c.h.b16 %v395
        %v702 = vunpack.c.l.b16 %v396
        %v703 = vunpack.c.h.b16 %v396
        %v704 = vunpack.c.l.b16 %v397
        %v705 = vunpack.c.h.b16 %v397
        %v706 = vunpack.c.l.b16 %v398
        %v707 = vunpack.c.h.b16 %v398
        %v708 = vunpack.c.l.b16 %v399
        %v709 = vunpack.c.h.b16 %v399
        %v710 = vunpack.c.l.b16 %v400
        %v711 = vunpack.c.h.b16 %v400
        %v712 = vunpack.c.l.b16 %v401
        %v713 = vunpack.c.h.b16 %v401
        %v714 = vunpack.c.l.b16 %v402
        %v715 = vunpack.c.h.b16 %v402
        %v716 = vunpack.c.l.b16 %v403
        %v717 = vunpack.c.h.b16 %v403
        %v718 = vunpack.c.l.b16 %v404
        %v719 = vunpack.c.h.b16 %v404
        %v720 = vunpack.c.l.b16 %v405
        %v721 = vunpack.c.h.b16 %v405
        %v722 = vunpack.c.l.b16 %v406
        %v723 = vunpack.c.h.b16 %v406
        %v724 = vunpack.c.l.b16 %v407
        %v725 = vunpack.c.h.b16 %v407
        %v726 = vunpack.c.l.b16 %v408
        %v727 = vunpack.c.h.b16 %v408
        %v728 = vunpack.c.l.b16 %v409
        %v729 = vunpack.c.h.b16 %v409
        %v730 = vunpack.c.l.b16 %v410
        %v731 = vunpack.c.h.b16 %v410
        %v732 = vunpack.c.l.b16 %v411
        %v733 = vunpack.c.h.b16 %v411
        %v734 = vunpack.c.l.b16 %v412
        %v735 = vunpack.c.h.b16 %v412
        %v736 = vunpack.c.l.b16 %v413
        %v737 = vunpack.c.h.b16 %v413
        %v738 = vunpack.c.l.b16 %v414
        %v739 = vunpack.c.h.b16 %v414
        %v740 = vunpack.c.l.b16 %v415
        %v741 = vunpack.c.h.b16 %v415
        %v742 = vunpack.c.l.b16 %v416
        %v743 = vunpack.c.h.b16 %v416
        %v744 = vunpack.c.l.b16 %v417
        %v745 = vunpack.c.h.b16 %v417
        %v746 = vunpack.c.l.b16 %v418
        %v747 = vunpack.c.h.b16 %v418
        %v748 = vunpack.c.l.b16 %v419
        %v749 = vunpack.c.h.b16 %v419
        %v750 = vunpack.c.l.b16 %v420
        %v751 = vunpack.c.h.b16 %v420
        %v752 = vunpack.c.l.b16 %v421
        %v753 = vunpack.c.h.b16 %v421
        %v754 = vunpack.c.l.b16 %v422
        %v755 = vunpack.c.h.b16 %v422
        %v756 = vunpack.c.l.b16 %v423
        %v757 = vunpack.c.h.b16 %v423
        %v758 = vunpack.c.l.b16 %v424
        %v759 = vunpack.c.h.b16 %v424
        %v760 = vunpack.c.l.b16 %v425
        %v761 = vunpack.c.h.b16 %v425
        %v762 = vunpack.c.l.b16 %v426
        %v763 = vunpack.c.h.b16 %v426
        %v764 = vunpack.c.l.b16 %v427
        %v765 = vunpack.c.h.b16 %v427
        %v766 = vunpack.c.l.b16 %v428
        %v767 = vunpack.c.h.b16 %v428
        %v768 = vunpack.c.l.b16 %v429
        %v769 = vunpack.c.h.b16 %v429
        %v770 = vunpack.c.l.b16 %v430
        %v771 = vunpack.c.h.b16 %v430
        %v772 = vunpack.c.l.b16 %v431
        %v773 = vunpack.c.h.b16 %v431
        %v774 = vunpack.c.l.b16 %v432
        %v775 = vunpack.c.h.b16 %v432
        %v776 = vunpack.c.l.b16 %v433
        %v777 = vunpack.c.h.b16 %v433
        %v778 = vunpack.c.l.b16 %v434
        %v779 = vunpack.c.h.b16 %v434
        %v780 = vunpack.c.l.b16 %v435
        %v781 = vunpack.c.h.b16 %v435
        %v782 = vunpack.c.l.b16 %v436
        %v783 = vunpack.c.h.b16 %v436
        %v784 = vunpack.c.l.b16 %v437
        %v785 = vunpack.c.h.b16 %v437
        %v786 = vunpack.c.l.b16 %v438
        %v787 = vunpack.c.h.b16 %v438
        %v788 = vunpack.c.l.b16 %v439
        %v789 = vunpack.c.h.b16 %v439
        %v790 = vunpack.c.l.b16 %v440
        %v791 = vunpack.c.h.b16 %v440
        %v792 = vunpack.c.l.b16 %v441
        %v793 = vunpack.c.h.b16 %v441
        %v794 = vunpack.c.l.b16 %v442
        %v795 = vunpack.c.h.b16 %v442
        %v796 = vunpack.c.l.b16 %v443
        %v797 = vunpack.c.h.b16 %v443
        %v798 = vunpack.c.l.b16 %v444
        %v799 = vunpack.c.h.b16 %v444
        %v800 = vunpack.c.l.b16 %v445
        %v801 = vunpack.c.h.b16 %v445
        %v802 = vunpack.c.l.b16 %v446
        %v803 = vunpack.c.h.b16 %v446
        %v804 = vunpack.c.l.b16 %v447
        %v805 = vunpack.c.h.b16 %v447
        %v806 = vunpack.c.l.b16 %v448
        %v807 = vunpack.c.h.b16 %v448
        %v808 = vunpack.c.l.b16 %v449
        %v809 = vunpack.c.h.b16 %v449
        %v810 = vunpack.c.l.b16 %v450
        %v811 = vunpack.c.h.b16 %v450
        %v812 = vunpack.c.l.b16 %v451
        %v813 = vunpack.c.h.b16 %v451
        %v814 = vunpack.c.l.b16 %v452
        %v815 = vunpack.c.h.b16 %v452
        %v816 = vunpack.c.l.b16 %v453
        %v817 = vunpack.c.h.b16 %v453
        %v818 = vunpack.c.l.b16 %v454
        %v819 = vunpack.c.h.b16 %v454
        %v820 = vunpack.c.l.b16 %v455
        %v821 = vunpack.c.h.b16 %v455
        %v822 = vunpack.c.l.b16 %v456
        %v823 = vunpack.c.h.b16 %v456
        %v824 = vunpack.c.l.b16 %v457
        %v825 = vunpack.c.h.b16 %v457
        %v826 = vunpack.c.l.b16 %v458
        %v827 = vunpack.c.h.b16 %v458
        %v828 = vunpack.c.l.b16 %v459
        %v829 = vunpack.c.h.b16 %v459
        %v830 = vunpack.c.l.b16 %v460
        %v831 = vunpack.c.h.b16 %v460
        %v832 = vunpack.c.l.b16 %v461
        %v833 = vunpack.c.h.b16 %v461
        %v834 = vunpack.c.l.b16 %v462
        %v835 = vunpack.c.h.b16 %v462
        %v836 = vunpack.c.l.b16 %v463
        %v837 = vunpack.c.h.b16 %v463
        %v838 = vunpack.c.l.b16 %v464
        %v839 = vunpack.c.h.b16 %v464
        %v840 = vunpack.c.l.b16 %v465
        %v841 = vunpack.c.h.b16 %v465
        %v842 = vunpack.c.l.b16 %v466
        %v843 = vunpack.c.h.b16 %v466
        %v844 = vunpack.c.l.b16 %v467
        %v845 = vunpack.c.h.b16 %v467
        %v846 = vunpack.c.l.b16 %v468
        %v847 = vunpack.c.h.b16 %v468
        %v848 = vunpack.c.l.b16 %v469
        %v849 = vunpack.c.h.b16 %v469
        %v850 = vunpack.c.l.b16 %v470
        %v851 = vunpack.c.h.b16 %v470
        %v852 = vunpack.c.l.b16 %v471
        %v853 = vunpack.c.h.b16 %v471
        %v854 = vunpack.c.l.b16 %v472
        %v855 = vunpack.c.h.b16 %v472
        %v856 = vunpack.c.l.b16 %v473
        %v857 = vunpack.c.h.b16 %v473
        %v858 = vpack.c.b16 %v604, %v602
        %v859 = vpack.c.b16 %v605, %v603
        %v860 = vpack.c.b16 %v608, %v606
        %v861 = vpack.c.b16 %v609, %v607
        %v862 = vpack.c.b16 %v612, %v610
        %v863 = vpack.c.b16 %v613, %v611
        %v864 = vpack.c.b16 %v616, %v614
        %v865 = vpack.c.b16 %v617, %v615
        %v866 = vpack.c.b16 %v620, %v618
        %v867 = vpack.c.b16 %v621, %v619
        %v868 = vpack.c.b16 %v624, %v622
        %v869 = vpack.c.b16 %v625, %v623
        %v870 = vpack.c.b16 %v628, %v626
        %v871 = vpack.c.b16 %v629, %v627
        %v872 = vpack.c.b16 %v632, %v630
        %v873 = vpack.c.b16 %v633, %v631
        %v874 = vpack.c.b16 %v636, %v634
        %v875 = vpack.c.b16 %v637, %v635
        %v876 = vpack.c.b16 %v640, %v638
        %v877 = vpack.c.b16 %v641, %v639
        %v878 = vpack.c.b16 %v644, %v642
        %v879 = vpack.c.b16 %v645, %v643
        %v880 = vpack.c.b16 %v648, %v646
        %v881 = vpack.c.b16 %v649, %v647
        %v882 = vpack.c.b16 %v652, %v650
        %v883 = vpack.c.b16 %v653, %v651
        %v884 = vpack.c.b16 %v656, %v654
        %v885 = vpack.c.b16 %v657, %v655
        %v886 = vpack.c.b16 %v660, %v658
        %v887 = vpack.c.b16 %v661, %v659
        %v888 = vpack.c.b16 %v664, %v662
        %v889 = vpack.c.b16 %v665, %v663
        %v890 = vpack.c.b16 %v668, %v666
        %v891 = vpack.c.b16 %v669, %v667
        %v892 = vpack.c.b16 %v672, %v670
        %v893 = vpack.c.b16 %v673, %v671
        %v894 = vpack.c.b16 %v676, %v674
        %v895 = vpack.c.b16 %v677, %v675
        %v896 = vpack.c.b16 %v680, %v678
        %v897 = vpack.c.b16 %v681, %v679
        %v898 = vpack.c.b16 %v684, %v682
        %v899 = vpack.c.b16 %v685, %v683
        %v900 = vpack.c.b16 %v688, %v686
        %v901 = vpack.c.b16 %v689, %v687
        %v902 = vpack.c.b16 %v692, %v690
        %v903 = vpack.c.b16 %v693, %v691
        %v904 = vpack.c.b16 %v696, %v694
        %v905 = vpack.c.b16 %v697, %v695
        %v906 = vpack.c.b16 %v700, %v698
        %v907 = vpack.c.b16 %v701, %v699
        %v908 = vpack.c.b16 %v704, %v702
        %v909 = vpack.c.b16 %v705, %v703
        %v910 = vpack.c.b16 %v708, %v706
        %v911 = vpack.c.b16 %v709, %v707
        %v912 = vpack.c.b16 %v712, %v710
        %v913 = vpack.c.b16 %v713, %v711
        %v914 = vpack.c.b16 %v716, %v714
        %v915 = vpack.c.b16 %v717, %v715
        %v916 = vpack.c.b16 %v720, %v718
        %v917 = vpack.c.b16 %v721, %v719
        %v918 = vpack.c.b16 %v724, %v722
        %v919 = vpack.c.b16 %v725, %v723
        %v920 = vpack.c.b16 %v728, %v726
        %v921 = vpack.c.b16 %v729, %v727
        %v922 = vpack.c.b16 %v732, %v730
        %v923 = vpack.c.b16 %v733, %v731
        %v924 = vpack.c.b16 %v736, %v734
        %v925 = vpack.c.b16 %v737, %v735
        %v926 = vpack.c.b16 %v740, %v738
        %v927 = vpack.c.b16 %v741, %v739
        %v928 = vpack.c.b16 %v744, %v742
        %v929 = vpack.c.b16 %v745, %v743
        %v930 = vpack.c.b16 %v748, %v746
        %v931 = vpack.c.b16 %v749, %v747
        %v932 = vpack.c.b16 %v752, %v750
        %v933 = vpack.c.b16 %v753, %v751
        %v934 = vpack.c.b16 %v756, %v754
        %v935 = vpack.c.b16 %v757, %v755
        %v936 = vpack.c.b16 %v760, %v758
        %v937 = vpack.c.b16 %v761, %v759
        %v938 = vpack.c.b16 %v764, %v762
        %v939 = vpack.c.b16 %v765, %v763
        %v940 = vpack.c.b16 %v768, %v766
        %v941 = vpack.c.b16 %v769, %v767
        %v942 = vpack.c.b16 %v772, %v770
        %v943 = vpack.c.b16 %v773, %v771
        %v944 = vpack.c.b16 %v776, %v774
        %v945 = vpack.c.b16 %v777, %v775
        %v946 = vpack.c.b16 %v780, %v778
        %v947 = vpack.c.b16 %v781, %v779
        %v948 = vpack.c.b16 %v784, %v782
        %v949 = vpack.c.b16 %v785, %v783
        %v950 = vpack.c.b16 %v788, %v786
        %v951 = vpack.c.b16 %v789, %v787
        %v952 = vpack.c.b16 %v792, %v790
        %v953 = vpack.c.b16 %v793, %v791
        %v954 = vpack.c.b16 %v796, %v794
        %v955 = vpack.c.b16 %v797, %v795
        %v956 = vpack.c.b16 %v800, %v798
        %v957 = vpack.c.b16 %v801, %v799
        %v958 = vpack.c.b16 %v804, %v802
        %v959 = vpack.c.b16 %v805, %v803
        %v960 = vpack.c.b16 %v808, %v806
        %v961 = vpack.c.b16 %v809, %v807
        %v962 = vpack.c.b16 %v812, %v810
        %v963 = vpack.c.b16 %v813, %v811
        %v964 = vpack.c.b16 %v816, %v814
        %v965 = vpack.c.b16 %v817, %v815
        %v966 = vpack.c.b16 %v820, %v818
        %v967 = vpack.c.b16 %v821, %v819
        %v968 = vpack.c.b16 %v824, %v822
        %v969 = vpack.c.b16 %v825, %v823
        %v970 = vpack.c.b16 %v828, %v826
        %v971 = vpack.c.b16 %v829, %v827
        %v972 = vpack.c.b16 %v832, %v830
        %v973 = vpack.c.b16 %v833, %v831
        %v974 = vpack.c.b16 %v836, %v834
        %v975 = vpack.c.b16 %v837, %v835
        %v976 = vpack.c.b16 %v840, %v838
        %v977 = vpack.c.b16 %v841, %v839
        %v978 = vpack.c.b16 %v844, %v842
        %v979 = vpack.c.b16 %v845, %v843
        %v980 = vpack.c.b16 %v848, %v846
        %v981 = vpack.c.b16 %v849, %v847
        %v982 = vpack.c.b16 %v852, %v850
        %v983 = vpack.c.b16 %v853, %v851
        %v984 = vpack.c.b16 %v856, %v854
        %v985 = vpack.c.b16 %v857, %v855
        %1114 = vmatprep.subr.bf16.mxu0 %v859
        %1115 = vmatpush1.bf16.msra.mxu0 %v858
        %1116 = vmatprep.subr.bf16.mxu0 %v861
        %1117 = vmatpush1.bf16.msra.mxu0 %v860
        %1118 = vmatprep.subr.bf16.mxu0 %v863
        %1119 = vmatpush1.bf16.msra.mxu0 %v862
        %1120 = vmatprep.subr.bf16.mxu0 %v865
        %1121 = vmatpush1.bf16.msra.mxu0 %v864
        %1122 = vmatprep.subr.bf16.mxu0 %v867
        %1123 = vmatpush1.bf16.msra.mxu0 %v866
        %1124 = vmatprep.subr.bf16.mxu0 %v869
        %1125 = vmatpush1.bf16.msra.mxu0 %v868
        %1126 = vmatprep.subr.bf16.mxu0 %v871
        %1127 = vmatpush1.bf16.msra.mxu0 %v870
        %1128 = vmatprep.subr.bf16.mxu0 %v873
        %1129 = vmatpush1.bf16.msra.mxu0 %v872
        %1130 = vmatprep.subr.bf16.mxu0 %v875
        %1131 = vmatpush1.bf16.msra.mxu0 %v874
        %1132 = vmatprep.subr.bf16.mxu0 %v877
        %1133 = vmatpush1.bf16.msra.mxu0 %v876
        %1134 = vmatprep.subr.bf16.mxu0 %v879
        %1135 = vmatpush1.bf16.msra.mxu0 %v878
        %1136 = vmatprep.subr.bf16.mxu0 %v881
        %1137 = vmatpush1.bf16.msra.mxu0 %v880
        %1138 = vmatprep.subr.bf16.mxu0 %v883
        %1139 = vmatpush1.bf16.msra.mxu0 %v882
        %1140 = vmatprep.subr.bf16.mxu0 %v885
        %1141 = vmatpush1.bf16.msra.mxu0 %v884
        %1142 = vmatprep.subr.bf16.mxu0 %v887
        %1143 = vmatpush1.bf16.msra.mxu0 %v886
        %1144 = vmatprep.subr.bf16.mxu0 %v889
        %1145 = vmatpush1.bf16.msra.mxu0 %v888
        %1146 = vmatprep.mubr.bf16.mxu0 %v339
        %1147 = vmatmul.mubr.bf16.gmra.mrb[0].mxu0 %v338
        %v1148 = vpop.f32.mrb[0].mxu0
        %v1149 = vadd.f32 0.0, %v1148
        %v1150 = vpop.f32.mrb[0].mxu0
        %v1151 = vadd.f32 0.0, %v1150
        %v1152 = vpop.f32.mrb[0].mxu0
        %v1153 = vpop.f32.mrb[0].mxu0
        %1154 = vdwg.mxu0
        %1155 = vmatprep.subr.bf16.mxu0 %v891
        %1156 = vmatpush1.bf16.msra.mxu0 %v890
        %1157 = vmatprep.subr.bf16.mxu0 %v893
        %1158 = vmatpush1.bf16.msra.mxu0 %v892
        %1159 = vmatprep.subr.bf16.mxu0 %v895
        %1160 = vmatpush1.bf16.msra.mxu0 %v894
        %1161 = vmatprep.subr.bf16.mxu0 %v897
        %1162 = vmatpush1.bf16.msra.mxu0 %v896
        %1163 = vmatprep.subr.bf16.mxu0 %v899
        %1164 = vmatpush1.bf16.msra.mxu0 %v898
        %1165 = vmatprep.subr.bf16.mxu0 %v901
        %1166 = vmatpush1.bf16.msra.mxu0 %v900
        %1167 = vmatprep.subr.bf16.mxu0 %v903
        %1168 = vmatpush1.bf16.msra.mxu0 %v902
        %1169 = vmatprep.subr.bf16.mxu0 %v905
        %1170 = vmatpush1.bf16.msra.mxu0 %v904
        %1171 = vmatprep.subr.bf16.mxu0 %v907
        %1172 = vmatpush1.bf16.msra.mxu0 %v906
        %1173 = vmatprep.subr.bf16.mxu0 %v909
        %1174 = vmatpush1.bf16.msra.mxu0 %v908
        %1175 = vmatprep.subr.bf16.mxu0 %v911
        %1176 = vmatpush1.bf16.msra.mxu0 %v910
        %1177 = vmatprep.subr.bf16.mxu0 %v913
        %1178 = vmatpush1.bf16.msra.mxu0 %v912
        %1179 = vmatprep.subr.bf16.mxu0 %v915
        %1180 = vmatpush1.bf16.msra.mxu0 %v914
        %1181 = vmatprep.subr.bf16.mxu0 %v917
        %1182 = vmatpush1.bf16.msra.mxu0 %v916
        %1183 = vmatprep.subr.bf16.mxu0 %v919
        %1184 = vmatpush1.bf16.msra.mxu0 %v918
        %1185 = vmatprep.subr.bf16.mxu0 %v921
        %1186 = vmatpush1.bf16.msra.mxu0 %v920
        %1187 = vmatprep.mubr.bf16.mxu0 %v341
        %1188 = vmatmul.mubr.bf16.gmra.mrb[0].mxu0 %v340
        %v1189 = vpop.f32.mrb[0].mxu0
        %v1190 = vadd.f32 %v1149, %v1189
        %v1191 = vpop.f32.mrb[0].mxu0
        %v1192 = vadd.f32 %v1151, %v1191
        %v1193 = vpop.f32.mrb[0].mxu0
        %v1194 = vpop.f32.mrb[0].mxu0
        %1195 = vdwg.mxu0
        %1196 = vmatprep.subr.bf16.mxu0 %v923
        %1197 = vmatpush1.bf16.msra.mxu0 %v922
        %1198 = vmatprep.subr.bf16.mxu0 %v925
        %1199 = vmatpush1.bf16.msra.mxu0 %v924
        %1200 = vmatprep.subr.bf16.mxu0 %v927
        %1201 = vmatpush1.bf16.msra.mxu0 %v926
        %1202 = vmatprep.subr.bf16.mxu0 %v929
        %1203 = vmatpush1.bf16.msra.mxu0 %v928
        %1204 = vmatprep.subr.bf16.mxu0 %v931
        %1205 = vmatpush1.bf16.msra.mxu0 %v930
        %1206 = vmatprep.subr.bf16.mxu0 %v933
        %1207 = vmatpush1.bf16.msra.mxu0 %v932
        %1208 = vmatprep.subr.bf16.mxu0 %v935
        %1209 = vmatpush1.bf16.msra.mxu0 %v934
        %1210 = vmatprep.subr.bf16.mxu0 %v937
        %1211 = vmatpush1.bf16.msra.mxu0 %v936
        %1212 = vmatprep.subr.bf16.mxu0 %v939
        %1213 = vmatpush1.bf16.msra.mxu0 %v938
        %1214 = vmatprep.subr.bf16.mxu0 %v941
        %1215 = vmatpush1.bf16.msra.mxu0 %v940
        %1216 = vmatprep.subr.bf16.mxu0 %v943
        %1217 = vmatpush1.bf16.msra.mxu0 %v942
        %1218 = vmatprep.subr.bf16.mxu0 %v945
        %1219 = vmatpush1.bf16.msra.mxu0 %v944
        %1220 = vmatprep.subr.bf16.mxu0 %v947
        %1221 = vmatpush1.bf16.msra.mxu0 %v946
        %1222 = vmatprep.subr.bf16.mxu0 %v949
        %1223 = vmatpush1.bf16.msra.mxu0 %v948
        %1224 = vmatprep.subr.bf16.mxu0 %v951
        %1225 = vmatpush1.bf16.msra.mxu0 %v950
        %1226 = vmatprep.subr.bf16.mxu0 %v953
        %1227 = vmatpush1.bf16.msra.mxu0 %v952
        %1228 = vmatprep.mubr.bf16.mxu0 %v343
        %1229 = vmatmul.mubr.bf16.gmra.mrb[0].mxu0 %v342
        %v1230 = vpop.f32.mrb[0].mxu0
        %v1231 = vadd.f32 %v1190, %v1230
        %v1232 = vpop.f32.mrb[0].mxu0
        %v1233 = vadd.f32 %v1192, %v1232
        %v1234 = vpop.f32.mrb[0].mxu0
        %v1235 = vpop.f32.mrb[0].mxu0
        %1236 = vdwg.mxu0
        %1237 = vmatprep.subr.bf16.mxu0 %v955
        %1238 = vmatpush1.bf16.msra.mxu0 %v954
        %1239 = vmatprep.subr.bf16.mxu0 %v957
        %1240 = vmatpush1.bf16.msra.mxu0 %v956
        %1241 = vmatprep.subr.bf16.mxu0 %v959
        %1242 = vmatpush1.bf16.msra.mxu0 %v958
        %1243 = vmatprep.subr.bf16.mxu0 %v961
        %1244 = vmatpush1.bf16.msra.mxu0 %v960
        %1245 = vmatprep.subr.bf16.mxu0 %v963
        %1246 = vmatpush1.bf16.msra.mxu0 %v962
        %1247 = vmatprep.subr.bf16.mxu0 %v965
        %1248 = vmatpush1.bf16.msra.mxu0 %v964
        %1249 = vmatprep.subr.bf16.mxu0 %v967
        %1250 = vmatpush1.bf16.msra.mxu0 %v966
        %1251 = vmatprep.subr.bf16.mxu0 %v969
        %1252 = vmatpush1.bf16.msra.mxu0 %v968
        %1253 = vmatprep.subr.bf16.mxu0 %v971
        %1254 = vmatpush1.bf16.msra.mxu0 %v970
        %1255 = vmatprep.subr.bf16.mxu0 %v973
        %1256 = vmatpush1.bf16.msra.mxu0 %v972
        %1257 = vmatprep.subr.bf16.mxu0 %v975
        %1258 = vmatpush1.bf16.msra.mxu0 %v974
        %1259 = vmatprep.subr.bf16.mxu0 %v977
        %1260 = vmatpush1.bf16.msra.mxu0 %v976
        %1261 = vmatprep.subr.bf16.mxu0 %v979
        %1262 = vmatpush1.bf16.msra.mxu0 %v978
        %1263 = vmatprep.subr.bf16.mxu0 %v981
        %1264 = vmatpush1.bf16.msra.mxu0 %v980
        %1265 = vmatprep.subr.bf16.mxu0 %v983
        %1266 = vmatpush1.bf16.msra.mxu0 %v982
        %1267 = vmatprep.subr.bf16.mxu0 %v985
        %1268 = vmatpush1.bf16.msra.mxu0 %v984
        %1269 = vmatprep.mubr.bf16.mxu0 %v345
        %1270 = vmatmul.mubr.bf16.gmra.mrb[0].mxu0 %v344
        %v1271 = vpop.f32.mrb[0].mxu0
        %v1272 = vadd.f32 %v1231, %v1271
        %v1273 = vpop.f32.mrb[0].mxu0
        %v1274 = vadd.f32 %v1233, %v1273
        %v1275 = vpop.f32.mrb[0].mxu0
        %v1276 = vpop.f32.mrb[0].mxu0
        %1277 = vdwg.mxu0
        %v1278 = vld [vmem:[%s2] sm:$0x3]
        %v1280 = vlaneseq
        %v1281 = vshrl.u32 %v1280, 7
        %v1282 = vsub.s32 0, %v1281
        %v1283 = vrot.slane %v1278, %v1282
        %v1284 = vlaneseq
        %v1285 = vshrl.u32 %v1284, 7
        %v1286 = vsub.s32 1, %v1285
        %v1287 = vrot.slane %v1278, %v1286
        %v1290 = vmul.f32 %v332, %v1283
        %v1291 = vmul.f32 %v332, %v1287
        %v1292 = vsub.f32 %v1272, %v1290
        %v1293 = vsub.f32 %v1274, %v1291
        %v1294 = vmul.f32 %v337, %v1292
        %v1295 = vmul.f32 %v337, %v1293
        %v1296 = vld [vmem:[%s3] sm:$0x3]
        %v1298 = vlaneseq
        %v1299 = vshrl.u32 %v1298, 7
        %v1300 = vsub.s32 0, %v1299
        %v1301 = vrot.slane %v1296, %v1300
        %v1302 = vlaneseq
        %v1303 = vshrl.u32 %v1302, 7
        %v1304 = vsub.s32 1, %v1303
        %v1305 = vrot.slane %v1296, %v1304
        %v1308 = vadd.f32 %v1294, %v1301
        %v1309 = vadd.f32 %v1295, %v1305
        %v1310 = vmax.f32 %v1308, 0.0
        %v1311 = vmax.f32 %v1309, 0.0
        %v1312 = vpack.c.bf16 %v1310, %v1310
        %v1313 = vpack.c.bf16 %v1311, %v1311
        %v1314 = vld [vmem:[#allocation7] sm:$0xf]
        %v1315 = vld [vmem:[#allocation7 + $0x4] sm:$0xf]
        %v1316 = vld [vmem:[#allocation7 + $0x8] sm:$0xf]
        %v1317 = vld [vmem:[#allocation7 + $0xc] sm:$0xf]
        %v1318 = vld [vmem:[#allocation7 + $0x10] sm:$0xf]
        %v1319 = vld [vmem:[#allocation7 + $0x14] sm:$0xf]
        %v1320 = vld [vmem:[#allocation7 + $0x18] sm:$0xf]
        %v1321 = vld [vmem:[#allocation7 + $0x1c] sm:$0xf]
        %v1322 = vld [vmem:[#allocation7 + $0x20] sm:$0xf]
        %v1323 = vld [vmem:[#allocation7 + $0x24] sm:$0xf]
        %v1324 = vld [vmem:[#allocation7 + $0x28] sm:$0xf]
        %v1325 = vld [vmem:[#allocation7 + $0x2c] sm:$0xf]
        %v1326 = vld [vmem:[#allocation7 + $0x30] sm:$0xf]
        %v1327 = vld [vmem:[#allocation7 + $0x34] sm:$0xf]
        %v1328 = vld [vmem:[#allocation7 + $0x38] sm:$0xf]
        %v1329 = vld [vmem:[#allocation7 + $0x3c] sm:$0xf]
        %v1330 = vld [vmem:[#allocation7 + $0x40] sm:$0xf]
        %v1331 = vld [vmem:[#allocation7 + $0x44] sm:$0xf]
        %v1332 = vld [vmem:[#allocation7 + $0x48] sm:$0xf]
        %v1333 = vld [vmem:[#allocation7 + $0x4c] sm:$0xf]
        %v1334 = vld [vmem:[#allocation7 + $0x50] sm:$0xf]
        %v1335 = vld [vmem:[#allocation7 + $0x54] sm:$0xf]
        %v1336 = vld [vmem:[#allocation7 + $0x58] sm:$0xf]
        %v1337 = vld [vmem:[#allocation7 + $0x5c] sm:$0xf]
        %v1338 = vld [vmem:[#allocation7 + $0x60] sm:$0xf]
        %v1339 = vld [vmem:[#allocation7 + $0x64] sm:$0xf]
        %v1340 = vld [vmem:[#allocation7 + $0x68] sm:$0xf]
        %v1341 = vld [vmem:[#allocation7 + $0x6c] sm:$0xf]
        %v1342 = vld [vmem:[#allocation7 + $0x70] sm:$0xf]
        %v1343 = vld [vmem:[#allocation7 + $0x74] sm:$0xf]
        %v1344 = vld [vmem:[#allocation7 + $0x78] sm:$0xf]
        %v1345 = vld [vmem:[#allocation7 + $0x7c] sm:$0xf]
        %v1346 = vld [vmem:[%s5] sm:$0x1]
        %v1348 = vlaneseq
        %v1349 = vshrl.u32 %v1348, 7
        %v1350 = vsub.s32 0, %v1349
        %v1351 = vrot.slane %v1346, %v1350
        %v1385 = vunpack.c.l.b16 %v1314
        %v1386 = vunpack.c.l.b16 %v1315
        %v1387 = vunpack.c.l.b16 %v1316
        %v1388 = vunpack.c.l.b16 %v1317
        %v1389 = vunpack.c.l.b16 %v1318
        %v1390 = vunpack.c.l.b16 %v1319
        %v1391 = vunpack.c.l.b16 %v1320
        %v1392 = vunpack.c.l.b16 %v1321
        %v1393 = vunpack.c.l.b16 %v1322
        %v1394 = vunpack.c.l.b16 %v1323
        %v1395 = vunpack.c.l.b16 %v1324
        %v1396 = vunpack.c.l.b16 %v1325
        %v1397 = vunpack.c.l.b16 %v1326
        %v1398 = vunpack.c.l.b16 %v1327
        %v1399 = vunpack.c.l.b16 %v1328
        %v1400 = vunpack.c.l.b16 %v1329
        %v1401 = vunpack.c.l.b16 %v1330
        %v1402 = vunpack.c.l.b16 %v1331
        %v1403 = vunpack.c.l.b16 %v1332
        %v1404 = vunpack.c.l.b16 %v1333
        %v1405 = vunpack.c.l.b16 %v1334
        %v1406 = vunpack.c.l.b16 %v1335
        %v1407 = vunpack.c.l.b16 %v1336
        %v1408 = vunpack.c.l.b16 %v1337
        %v1409 = vunpack.c.l.b16 %v1338
        %v1410 = vunpack.c.l.b16 %v1339
        %v1411 = vunpack.c.l.b16 %v1340
        %v1412 = vunpack.c.l.b16 %v1341
        %v1413 = vunpack.c.l.b16 %v1342
        %v1414 = vunpack.c.l.b16 %v1343
        %v1415 = vunpack.c.l.b16 %v1344
        %v1416 = vunpack.c.l.b16 %v1345
        %v1417 = vpack.c.b16 %v1386, %v1385
        %v1418 = vpack.c.b16 %v1388, %v1387
        %v1419 = vpack.c.b16 %v1390, %v1389
        %v1420 = vpack.c.b16 %v1392, %v1391
        %v1421 = vpack.c.b16 %v1394, %v1393
        %v1422 = vpack.c.b16 %v1396, %v1395
        %v1423 = vpack.c.b16 %v1398, %v1397
        %v1424 = vpack.c.b16 %v1400, %v1399
        %v1425 = vpack.c.b16 %v1402, %v1401
        %v1426 = vpack.c.b16 %v1404, %v1403
        %v1427 = vpack.c.b16 %v1406, %v1405
        %v1428 = vpack.c.b16 %v1408, %v1407
        %v1429 = vpack.c.b16 %v1410, %v1409
        %v1430 = vpack.c.b16 %v1412, %v1411
        %v1431 = vpack.c.b16 %v1414, %v1413
        %v1432 = vpack.c.b16 %v1416, %v1415
        %1449 = vmatprep.subr.bf16.mxu0 0
        %1450 = vmatpush1.bf16.msra.mxu0 %v1417
        %1451 = vmatprep.subr.bf16.mxu0 0
        %1452 = vmatpush1.bf16.msra.mxu0 %v1418
        %1453 = vmatprep.subr.bf16.mxu0 0
        %1454 = vmatpush1.bf16.msra.mxu0 %v1419
        %1455 = vmatprep.subr.bf16.mxu0 0
        %1456 = vmatpush1.bf16.msra.mxu0 %v1420
        %1457 = vmatprep.subr.bf16.mxu0 0
        %1458 = vmatpush1.bf16.msra.mxu0 %v1421
        %1459 = vmatprep.subr.bf16.mxu0 0
        %1460 = vmatpush1.bf16.msra.mxu0 %v1422
        %1461 = vmatprep.subr.bf16.mxu0 0
        %1462 = vmatpush1.bf16.msra.mxu0 %v1423
        %1463 = vmatprep.subr.bf16.mxu0 0
        %1464 = vmatpush1.bf16.msra.mxu0 %v1424
        %1465 = vmatprep.subr.bf16.mxu0 0
        %1466 = vmatpush1.bf16.msra.mxu0 %v1425
        %1467 = vmatprep.subr.bf16.mxu0 0
        %1468 = vmatpush1.bf16.msra.mxu0 %v1426
        %1469 = vmatprep.subr.bf16.mxu0 0
        %1470 = vmatpush1.bf16.msra.mxu0 %v1427
        %1471 = vmatprep.subr.bf16.mxu0 0
        %1472 = vmatpush1.bf16.msra.mxu0 %v1428
        %1473 = vmatprep.subr.bf16.mxu0 0
        %1474 = vmatpush1.bf16.msra.mxu0 %v1429
        %1475 = vmatprep.subr.bf16.mxu0 0
        %1476 = vmatpush1.bf16.msra.mxu0 %v1430
        %1477 = vmatprep.subr.bf16.mxu0 0
        %1478 = vmatpush1.bf16.msra.mxu0 %v1431
        %1479 = vmatprep.subr.bf16.mxu0 0
        %1480 = vmatpush1.bf16.msra.mxu0 %v1432
        %1481 = vmatprep.mubr.bf16.mxu0 %v1313
        %1482 = vmatmul.mubr.bf16.gmra.mrb[0].mxu0 %v1312
        %v1483 = vpop.f32.mrb[0].mxu0
        %v1484 = vadd.f32 %v1351, %v1483
        %v1485 = vpop.f32.mrb[0].mxu0
        %v1486 = vpop.f32.mrb[0].mxu0
        %v1487 = vpop.f32.mrb[0].mxu0
        %1488 = vdwg.mxu0
        %v1489 = vpack.c.bf16 %v1484, %v1484
        %1490 = vst [vmem:[%s296] sm:$0xf] %v1489
        %s1491 = sand.u32 %s163, 1
        %s1492 = scalar_lea.sflag [#allocation4], %s1491
        %s1493 = sand.u32 %s163, 1
        %s1494 = smul.addr %s1493, 4
        %s1495 = scalar_lea.vmem [#allocation8], %s1494
        // Predicated region
        $region57: #{tpu_custom_call.1} parent=43 // pred_check
          %p1496 = pneg %p173
        $region58: #{tpu_custom_call.1} parent=43 // pred_check_branch
          %1498 = sbr.rel (%p1496) target = $region60
        $region59: #{tpu_custom_call.1} parent=43 // pred_region
          %s1500 = ssub.s32 64, 64
          %1501 = vsyncadd %s1492, %s1500
          %s1502 = smul.addr %s24, 64
          %s1503 = scalar_lea.hbm %s6, %s1502
          %s1505 = sshll.u32 %s1495, 4
          %s1506 = int_to_ptr.vmem [resolvable:$true] %s1505
          %1508 = dma.vmem_to_hbm [thread:$0]  %s1506, 64, %s1503, %s1492
        $region60: #{tpu_custom_call.1} parent=43 // pred_fallthru
          _
      $region44: #{tpu_custom_call.1} parent=5 // pred_fallthru
        _
      %p1509 = scmp.le.s32.totalorder 2, %s19
      // Predicated region
      $region61: #{tpu_custom_call.1} parent=5 // pred_check
        %p1510 = pneg %p1509
      $region62: #{tpu_custom_call.1} parent=5 // pred_check_branch
        %1512 = sbr.rel (%p1510) target = $region64
      $region63: #{tpu_custom_call.1} parent=5 // pred_region
        %s1513 = ssub.s32 %s19, 2
        // Predicated region
        $region65: #{tpu_custom_call.1} parent=63 // pred_check
          %p1514 = pneg %p179
        $region66: #{tpu_custom_call.1} parent=63 // pred_check_branch
          %1516 = sbr.rel (%p1514) target = $region68
        $region67: #{tpu_custom_call.1} parent=63 // pred_region
          %s1517 = sand.u32 %s164, 1
          %s1518 = scalar_lea.sflag [#allocation4], %s1517
          %s1519 = sand.u32 %s164, 1
          %s1520 = smul.addr %s1519, 4
          %s1521 = scalar_lea.vmem [#allocation8], %s1520
          %1522 = dma.done %s1518, 64
        $region68: #{tpu_custom_call.1} parent=63 // pred_fallthru
          _
      $region64: #{tpu_custom_call.1} parent=5 // pred_fallthru
        _
    $region6: #{tpu_custom_call.1} parent=1 // loop_footer
      %s23 = sadd.s32 1, %s19
    $region7: #{tpu_custom_call.1} parent=1 // loop_footer_branch
      %18 = sbr.rel target = $region3
    $region8: #{tpu_custom_call.1} parent=1 // loop_exit
      _
    %1523 = vsyncpa [#allocation3], 1
    %s1524 = scalar_lea.sflag [#allocation3], 1
    %1525 = vsyncpa %s1524, 1
    %1526 = vsyncpa [#allocation6], 1
    %1527 = vsyncpa [#allocation4], 1
    %s1528 = scalar_lea.sflag [#allocation4], 1
    %1529 = vsyncpa %s1528, 1

</llo_original>
